<compile_context>
chip_gen: v7x
topology: tpu7x:2x2x1
jax: 0.10.0
libtpu: 0.0.40
codegen_flags: <defaults>
</compile_context>

<pallas_src>
import functools

import jax
import jax.numpy as jnp
from jax.experimental import pallas as pl
from jax.experimental.pallas import tpu as pltpu

# Match FP rounding between the folded kernel path and the layer-by-layer
# reference (avoid default bf16 matmul truncation on TPU).
jax.config.update("jax_default_matmul_precision", "highest")

# (in_features, out_features) for each of the 9 linear layers, in order.
LAYER_DIMS = [(4, 4), (4, 4), (4, 8),
              (8, 4), (4, 4), (4, 4),
              (4, 6), (6, 8), (8, 2)]

IN_DIM = LAYER_DIMS[0][0]        # 4
OUT_DIM = LAYER_DIMS[-1][1]      # 2
_LANES = 128
_SPR = _LANES // IN_DIM          # 32 samples packed per 128-lane input row
_OUT_COLS = _SPR * OUT_DIM       # 64 output columns per row
_FAST_PATH_MAX_BATCH = 16384     # below this, plain XLA is latency-optimal


def _bd_affine_kernel(x_ref, w_ref, b_ref, o_ref):
    """One MXU matmul per tile against the block-diagonal effective weight.

    x_ref : VMEM (TILE_ROWS, 128) f32 -- 32 samples x 4 features per row
    w_ref : VMEM (128, 64)        f32 -- kron(I_32, W_eff), block diagonal
    b_ref : VMEM (1, 64)          f32 -- b_eff tiled 32x
    o_ref : VMEM (TILE_ROWS, 64)  f32 -- 32 samples x 2 outputs per row
    """
    o_ref[...] = (
        jnp.dot(x_ref[...], w_ref[...],
                preferred_element_type=jnp.float32,
                precision=jax.lax.Precision.HIGHEST)
        + b_ref[...]
    )


def _fold_affine(params):
    """Compose the 9 linear layers into a single (W_eff, b_eff) in f32."""
    w_eff, b_eff = params[0]
    w_eff = w_eff.astype(jnp.float32)
    b_eff = b_eff.astype(jnp.float32)
    for (w, b) in params[1:]:
        w = w.astype(jnp.float32)
        b = b.astype(jnp.float32)
        b_eff = b_eff @ w + b
        w_eff = w_eff @ w
    return w_eff, b_eff              # (IN_DIM, OUT_DIM), (1, OUT_DIM)


def _default_tile_rows():
    """Rows per grid step sized for ~3 / 5 / 10 MB of traffic per step."""
    try:
        kind = jax.devices()[0].device_kind.lower()
    except Exception:
        kind = ""
    if "7" in kind:                   # v7x: 3.2 TB/s HBM, 64 MiB VMEM
        return 13312                  # ~10 MB/step, ~20.5 MiB dbuf footprint
    if "v6" in kind or "6e" in kind:  # v6e: ~1.4 TB/s HBM
        return 7168                   # ~5.3 MB/step, ~10.5 MiB footprint
    return 4096                       # v5e & others: ~3 MB/step, ~6 MiB


@functools.partial(jax.jit, static_argnames=("tile_rows", "use_kernel"))
def cpu_offload_model_forward(x, params, *, tile_rows=None, use_kernel=None):
    """x: (B, 4) float32; params: list of (W (in,out), b (1,out)) pairs."""
    batch = x.shape[0]
    x = x.astype(jnp.float32)
    w_eff, b_eff = _fold_affine(params)            # tiny, runs in XLA once

    if use_kernel is None:
        use_kernel = batch >= _FAST_PATH_MAX_BATCH
    if not use_kernel:
        # Small-batch fast path: launch/pad overhead would dominate the kernel.
        return x @ w_eff + b_eff.reshape(1, OUT_DIM)

    # --- natural-layout packing: 32 samples per 128-lane row ---------------
    if tile_rows is None:
        tile_rows = _default_tile_rows()
    tile_rows = max(8, (int(tile_rows) // 8) * 8)   # sublane-dense tiles

    rows = -(-batch // _SPR)                        # ceil(B / 32)
    if rows <= tile_rows:
        rows_pad = -(-rows // 8) * 8                # single tile, mult of 8
        tile_rows = rows_pad
    else:
        rows_pad = -(-rows // tile_rows) * tile_rows
    batch_pad = rows_pad * _SPR

    # Row-major flatten keeps sample-major order; when no padding is needed
    # this is a metadata-only view (no extra HBM pass, no transpose).
    x_flat = x.reshape(-1)
    if batch_pad != batch:
        x_flat = jnp.pad(x_flat, (0, (batch_pad - batch) * IN_DIM))
    x_rows = x_flat.reshape(rows_pad, _LANES)       # (rows, 128) lane-dense

    # Block-diagonal effective weight + tiled bias (32 copies of the 4x2 map).
    w_bd = jnp.kron(jnp.eye(_SPR, dtype=jnp.float32), w_eff)   # (128, 64)
    b_tiled = jnp.tile(b_eff.reshape(1, OUT_DIM), (1, _SPR))   # (1, 64)

    grid = (rows_pad // tile_rows,)

    # Double-buffered VMEM footprint (+ resident weight/bias, + headroom);
    # capped below v7x's 64 MiB physical VMEM.
    vmem_bytes = (2 * tile_rows * (_LANES + _OUT_COLS) * 4
                  + 2 * _LANES * _OUT_COLS * 4)
    vmem_limit = int(min(60 << 20, max(32 << 20, vmem_bytes * 3 // 2 + (2 << 20))))

    out_rows = pl.pallas_call(
        _bd_affine_kernel,
        out_shape=jax.ShapeDtypeStruct((rows_pad, _OUT_COLS), jnp.float32),
        grid_spec=pltpu.PrefetchScalarGridSpec(
            num_scalar_prefetch=0,
            grid=grid,
            in_specs=[
                pl.BlockSpec((tile_rows, _LANES), lambda i: (i, 0)),
                pl.BlockSpec((_LANES, _OUT_COLS), lambda i: (0, 0)),  # resident
                pl.BlockSpec((1, _OUT_COLS), lambda i: (0, 0)),       # resident
            ],
            out_specs=pl.BlockSpec((tile_rows, _OUT_COLS), lambda i: (i, 0)),
        ),
        compiler_params=pltpu.CompilerParams(
            dimension_semantics=("parallel",),   # split row tiles across TCs
            vmem_limit_bytes=vmem_limit,
        ),
    )(x_rows, w_bd, b_tiled)

    out = out_rows.reshape(batch_pad, OUT_DIM)      # no transpose needed
    return out[:batch]


def init_params(key):
    """Deterministic init mimicking nn.Linear's U(-1/sqrt(fan_in), 1/sqrt(fan_in))."""
    params = []
    for (fan_in, fan_out) in LAYER_DIMS:
        key, kw, kb = jax.random.split(key, 3)
        bound = 1.0 / jnp.sqrt(jnp.float32(fan_in))
        w = jax.random.uniform(kw, (fan_in, fan_out), jnp.float32,
                               minval=-bound, maxval=bound)
        b = jax.random.uniform(kb, (1, fan_out), jnp.float32,
                               minval=-bound, maxval=bound)
        params.append((w, b))
    return params


def reference_forward(x, params):
    h = x
    for w, b in params:
        h = h @ w + b
    return h


if __name__ == "__main__":
    key = jax.random.PRNGKey(0)
    key, kx1, kx2 = jax.random.split(key, 3)
    params = init_params(key)

    # 1) Tiny batch forced through the Pallas kernel (exercises pad + slice).
    x_small = jax.random.normal(kx1, (16, IN_DIM), jnp.float32)
    out_small = jax.block_until_ready(
        cpu_offload_model_forward(x_small, params, use_kernel=True))
    ref_small = reference_forward(x_small, params)
    assert out_small.shape == (16, OUT_DIM), out_small.shape
    assert jnp.allclose(out_small, ref_small, atol=1e-5, rtol=1e-4), (
        f"max abs err {jnp.max(jnp.abs(out_small - ref_small))}")

    # 2) Multi-tile grid path (grid > 1) with a small tile to exercise tiling.
    x_big = jax.random.normal(kx2, (8192, IN_DIM), jnp.float32)
    out_big = jax.block_until_ready(
        cpu_offload_model_forward(x_big, params, tile_rows=64, use_kernel=True))
    ref_big = reference_forward(x_big, params)
    assert out_big.shape == (8192, OUT_DIM), out_big.shape
    assert jnp.allclose(out_big, ref_big, atol=1e-5, rtol=1e-4), (
        f"max abs err {jnp.max(jnp.abs(out_big - ref_big))}")

    # 3) Default small-batch fast path (plain XLA, no pallas_call).
    out_fast = jax.block_until_ready(cpu_offload_model_forward(x_small, params))
    assert jnp.allclose(out_fast, ref_small, atol=1e-5, rtol=1e-4)

    print("KERNEL_OK")
</pallas_src>

<mosaic_0001>
module attributes {stable_mosaic.version = 11 : i64} {
  func.func @_bd_affine_kernel(%arg0: i32, %arg1: memref<8x128xf32, #tpu.memory_space<vmem>>, %arg2: memref<128x64xf32, #tpu.memory_space<vmem>>, %arg3: memref<1x64xf32, #tpu.memory_space<vmem>>, %arg4: memref<8x64xf32, #tpu.memory_space<vmem>>) attributes {dimension_semantics = [#tpu.dimension_semantics<parallel>], iteration_bounds = array<i64: 1>, scalar_prefetch = 0 : i64, scratch_operands = 0 : i64, tpu.core_type = #tpu.core_type<tc>, window_params = [{transform_indices = @transform_0, window_bounds = array<i64: 8, 128>}, {pipeline_mode = #tpu.pipeline_mode<synchronous>, transform_indices = @transform_1, window_bounds = array<i64: 128, 64>}, {pipeline_mode = #tpu.pipeline_mode<synchronous>, transform_indices = @transform_2, window_bounds = array<i64: 1, 64>}, {transform_indices = @transform_3, window_bounds = array<i64: 8, 64>}]} {
    %c0 = arith.constant 0 : index
    %c0_0 = arith.constant 0 : index
    %0 = vector.load %arg1[%c0, %c0_0] : memref<8x128xf32, #tpu.memory_space<vmem>>, vector<8x128xf32>
    %c0_1 = arith.constant 0 : index
    %c0_2 = arith.constant 0 : index
    %1 = vector.load %arg2[%c0_1, %c0_2] : memref<128x64xf32, #tpu.memory_space<vmem>>, vector<128x64xf32>
    %cst = arith.constant dense<0.000000e+00> : vector<8x64xf32>
    %2 = tpu.matmul %0, %1, %cst {dimension_numbers = #tpu.dot_dimension_numbers<[1], [0], [0], [1], [0, 0, 1, 1], [], []>, precision = #tpu.contract_precision<fp32>} : vector<8x128xf32>, vector<128x64xf32>, vector<8x64xf32> -> vector<8x64xf32>
    %c0_3 = arith.constant 0 : index
    %c0_4 = arith.constant 0 : index
    %3 = vector.load %arg3[%c0_3, %c0_4] : memref<1x64xf32, #tpu.memory_space<vmem>>, vector<1x64xf32>
    %4 = vector.broadcast %3 : vector<1x64xf32> to vector<8x64xf32>
    %5 = arith.addf %2, %4 : vector<8x64xf32>
    %c0_5 = arith.constant 0 : index
    %c0_6 = arith.constant 0 : index
    %6 = vector.load %arg4[%c0_5, %c0_6] : memref<8x64xf32, #tpu.memory_space<vmem>>, vector<8x64xf32>
    tpu.vector_store %arg4[%c0_5, %c0_6], %5 {strides = array<i32>} : memref<8x64xf32, #tpu.memory_space<vmem>>, vector<8x64xf32>,
    return
  }
  func.func @transform_0(%arg0: i32) -> (i32, i32) {
    %c0_i32 = arith.constant 0 : i32
    %c0_i32_0 = arith.constant 0 : i32
    return %arg0, %c0_i32 : i32, i32
  }
  func.func @transform_1(%arg0: i32) -> (i32, i32) {
    %c0_i32 = arith.constant 0 : i32
    %c0_i32_0 = arith.constant 0 : i32
    %c0_i32_1 = arith.constant 0 : i32
    return %c0_i32, %c0_i32_0 : i32, i32
  }
  func.func @transform_2(%arg0: i32) -> (i32, i32) {
    %c0_i32 = arith.constant 0 : i32
    %c0_i32_0 = arith.constant 0 : i32
    %c0_i32_1 = arith.constant 0 : i32
    return %c0_i32, %c0_i32_0 : i32, i32
  }
  func.func @transform_3(%arg0: i32) -> (i32, i32) {
    %c0_i32 = arith.constant 0 : i32
    %c0_i32_0 = arith.constant 0 : i32
    return %arg0, %c0_i32 : i32, i32
  }
}

</mosaic_0001>

<llo_original>
// kernel: cpu_offload_model_forward.1
$region0: #{cpu_offload_model_forward.1}
  #allocation0 [shape = 'u32[]', space=smem, size = 0x4, offset = 0x4, fixed_abs, tag = 'smem constant byte address 0x4 - core index']
  #allocation1 [shape = 'u32[144,128]{1,0:T(1,128)}', space=vmem, size = 0x12000, scoped, tag = 'internal scratch']
  %s0 = inlined_call_operand.vmem [shape: f32[8,128], index: 0, kind: input, shape index: {}]
  %s1 = inlined_call_operand.vmem [shape: f32[128,64], index: 1, kind: input, shape index: {}]
  %s2 = inlined_call_operand.vmem [shape: f32[1,64], index: 2, kind: input, shape index: {}]
  %s3 = inlined_call_operand.vmem [shape: f32[8,64], index: 3, kind: output, shape index: {}]
  %s4 = sld [smem:[#allocation0]]
  $region22: #{cpu_offload_model_forward.1} parent=0
    _
  %s6 = ssub.s32 1, %s4
  %s7 = scalar_select 0, %s6, %s4
  // Predicated region
  $region2: #{cpu_offload_model_forward.1} parent=0 // pred_check
    _
  $region3: #{cpu_offload_model_forward.1} parent=0 // pred_check_branch
    %9 = sbr.rel (0) target = $region5
  $region4: #{cpu_offload_model_forward.1} parent=0 // pred_region
    _
  $region5: #{cpu_offload_model_forward.1} parent=0 // pred_fallthru
    _
  // Predicated region
  $region6: #{cpu_offload_model_forward.1} parent=0 // pred_check
    _
  $region7: #{cpu_offload_model_forward.1} parent=0 // pred_check_branch
    %11 = sbr.rel (0) target = $region9
  $region8: #{cpu_offload_model_forward.1} parent=0 // pred_region
    _
  $region9: #{cpu_offload_model_forward.1} parent=0 // pred_fallthru
    _
  // Predicated region
  $region10: #{cpu_offload_model_forward.1} parent=0 // pred_check
    _
  $region11: #{cpu_offload_model_forward.1} parent=0 // pred_check_branch
    %13 = sbr.rel (0) target = $region13
  $region12: #{cpu_offload_model_forward.1} parent=0 // pred_region
    _
  $region13: #{cpu_offload_model_forward.1} parent=0 // pred_fallthru
    _
  %v14 = vld [vmem:[%s0] sm:$0xff]
  %v15 = vld [vmem:[%s1] sm:$0xff]
  %v16 = vld [vmem:[%s1 + $0x8] sm:$0xff]
  %v17 = vld [vmem:[%s1 + $0x10] sm:$0xff]
  %v18 = vld [vmem:[%s1 + $0x18] sm:$0xff]
  %v19 = vld [vmem:[%s1 + $0x20] sm:$0xff]
  %v20 = vld [vmem:[%s1 + $0x28] sm:$0xff]
  %v21 = vld [vmem:[%s1 + $0x30] sm:$0xff]
  %v22 = vld [vmem:[%s1 + $0x38] sm:$0xff]
  %v23 = vld [vmem:[%s1 + $0x40] sm:$0xff]
  %v24 = vld [vmem:[%s1 + $0x48] sm:$0xff]
  %v25 = vld [vmem:[%s1 + $0x50] sm:$0xff]
  %v26 = vld [vmem:[%s1 + $0x58] sm:$0xff]
  %v27 = vld [vmem:[%s1 + $0x60] sm:$0xff]
  %v28 = vld [vmem:[%s1 + $0x68] sm:$0xff]
  %v29 = vld [vmem:[%s1 + $0x70] sm:$0xff]
  %v30 = vld [vmem:[%s1 + $0x78] sm:$0xff]
  %v31 = vld [vmem:[%s2] sm:$0x1]
  %v33 = vlaneseq
  %v34 = vshrl.u32 %v33, 7
  %v35 = vsub.s32 0, %v34
  %v36 = vrot.slane %v31, %v35
  %38 = vmatprep.subr.mxu0 0.0
  %v39 = vand.u32 %v15, 4294901760
  %40 = vmatpush1.msra.mxu0 %v39
  %41 = vmatprep.subr.mxu0 0.0
  %v42 = vand.u32 %v16, 4294901760
  %43 = vmatpush1.msra.mxu0 %v42
  %44 = vmatprep.subr.mxu0 0.0
  %v45 = vand.u32 %v17, 4294901760
  %46 = vmatpush1.msra.mxu0 %v45
  %47 = vmatprep.subr.mxu0 0.0
  %v48 = vand.u32 %v18, 4294901760
  %49 = vmatpush1.msra.mxu0 %v48
  %50 = vmatprep.subr.mxu0 0.0
  %v51 = vand.u32 %v19, 4294901760
  %52 = vmatpush1.msra.mxu0 %v51
  %53 = vmatprep.subr.mxu0 0.0
  %v54 = vand.u32 %v20, 4294901760
  %55 = vmatpush1.msra.mxu0 %v54
  %56 = vmatprep.subr.mxu0 0.0
  %v57 = vand.u32 %v21, 4294901760
  %58 = vmatpush1.msra.mxu0 %v57
  %59 = vmatprep.subr.mxu0 0.0
  %v60 = vand.u32 %v22, 4294901760
  %61 = vmatpush1.msra.mxu0 %v60
  %62 = vmatprep.subr.mxu0 0.0
  %v63 = vand.u32 %v23, 4294901760
  %64 = vmatpush1.msra.mxu0 %v63
  %65 = vmatprep.subr.mxu0 0.0
  %v66 = vand.u32 %v24, 4294901760
  %67 = vmatpush1.msra.mxu0 %v66
  %68 = vmatprep.subr.mxu0 0.0
  %v69 = vand.u32 %v25, 4294901760
  %70 = vmatpush1.msra.mxu0 %v69
  %71 = vmatprep.subr.mxu0 0.0
  %v72 = vand.u32 %v26, 4294901760
  %73 = vmatpush1.msra.mxu0 %v72
  %74 = vmatprep.subr.mxu0 0.0
  %v75 = vand.u32 %v27, 4294901760
  %76 = vmatpush1.msra.mxu0 %v75
  %77 = vmatprep.subr.mxu0 0.0
  %v78 = vand.u32 %v28, 4294901760
  %79 = vmatpush1.msra.mxu0 %v78
  %80 = vmatprep.subr.mxu0 0.0
  %v81 = vand.u32 %v29, 4294901760
  %82 = vmatpush1.msra.mxu0 %v81
  %83 = vmatprep.subr.mxu0 0.0
  %v84 = vand.u32 %v30, 4294901760
  %85 = vmatpush1.msra.mxu0 %v84
  %86 = vmatprep.subr.mxu0 0.0
  %87 = vmatpush1.msra.mxu0 0.0
  %88 = vmatprep.subr.mxu0 0.0
  %89 = vmatpush1.msra.mxu0 0.0
  %90 = vmatprep.subr.mxu0 0.0
  %91 = vmatpush1.msra.mxu0 0.0
  %92 = vmatprep.subr.mxu0 0.0
  %93 = vmatpush1.msra.mxu0 0.0
  %94 = vmatprep.subr.mxu0 0.0
  %95 = vmatpush1.msra.mxu0 0.0
  %96 = vmatprep.subr.mxu0 0.0
  %97 = vmatpush1.msra.mxu0 0.0
  %98 = vmatprep.subr.mxu0 0.0
  %99 = vmatpush1.msra.mxu0 0.0
  %100 = vmatprep.subr.mxu0 0.0
  %101 = vmatpush1.msra.mxu0 0.0
  %102 = vmatprep.subr.mxu0 0.0
  %103 = vmatpush1.msra.mxu0 0.0
  %104 = vmatprep.subr.mxu0 0.0
  %105 = vmatpush1.msra.mxu0 0.0
  %106 = vmatprep.subr.mxu0 0.0
  %107 = vmatpush1.msra.mxu0 0.0
  %108 = vmatprep.subr.mxu0 0.0
  %109 = vmatpush1.msra.mxu0 0.0
  %110 = vmatprep.subr.mxu0 0.0
  %111 = vmatpush1.msra.mxu0 0.0
  %112 = vmatprep.subr.mxu0 0.0
  %113 = vmatpush1.msra.mxu0 0.0
  %114 = vmatprep.subr.mxu0 0.0
  %115 = vmatpush1.msra.mxu0 0.0
  %116 = vmatprep.subr.mxu0 0.0
  %117 = vmatpush1.msra.mxu0 0.0
  %118 = vmatprep.mubr.f32.mxu0 0.0
  %v119 = vand.u32 %v14, 4294901760
  %v120 = vsub.f32 %v14, %v119
  %v121 = vand.u32 %v120, 4294901760
  %v122 = vsub.f32 %v120, %v121
  %v123 = vand.u32 %v122, 4294901760
  %124 = vmatmul.mubr.f32.gmra.mrb[0].mxu0 %v123
  %v125 = vpop.f32.mrb[0].mxu0
  %v126 = vadd.f32 %v36, %v125
  %v127 = vpop.f32.mrb[0].mxu0
  %128 = vdwg.mxu0
  %129 = vmatprep.subr.mxu0 0.0
  %v130 = vand.u32 %v15, 4294901760
  %v131 = vsub.f32 %v15, %v130
  %v132 = vand.u32 %v131, 4294901760
  %v133 = vsub.f32 %v131, %v132
  %v134 = vand.u32 %v133, 4294901760
  %135 = vmatpush1.msra.mxu0 %v134
  %136 = vmatprep.subr.mxu0 0.0
  %v137 = vand.u32 %v16, 4294901760
  %v138 = vsub.f32 %v16, %v137
  %v139 = vand.u32 %v138, 4294901760
  %v140 = vsub.f32 %v138, %v139
  %v141 = vand.u32 %v140, 4294901760
  %142 = vmatpush1.msra.mxu0 %v141
  %143 = vmatprep.subr.mxu0 0.0
  %v144 = vand.u32 %v17, 4294901760
  %v145 = vsub.f32 %v17, %v144
  %v146 = vand.u32 %v145, 4294901760
  %v147 = vsub.f32 %v145, %v146
  %v148 = vand.u32 %v147, 4294901760
  %149 = vmatpush1.msra.mxu0 %v148
  %150 = vmatprep.subr.mxu0 0.0
  %v151 = vand.u32 %v18, 4294901760
  %v152 = vsub.f32 %v18, %v151
  %v153 = vand.u32 %v152, 4294901760
  %v154 = vsub.f32 %v152, %v153
  %v155 = vand.u32 %v154, 4294901760
  %156 = vmatpush1.msra.mxu0 %v155
  %157 = vmatprep.subr.mxu0 0.0
  %v158 = vand.u32 %v19, 4294901760
  %v159 = vsub.f32 %v19, %v158
  %v160 = vand.u32 %v159, 4294901760
  %v161 = vsub.f32 %v159, %v160
  %v162 = vand.u32 %v161, 4294901760
  %163 = vmatpush1.msra.mxu0 %v162
  %164 = vmatprep.subr.mxu0 0.0
  %v165 = vand.u32 %v20, 4294901760
  %v166 = vsub.f32 %v20, %v165
  %v167 = vand.u32 %v166, 4294901760
  %v168 = vsub.f32 %v166, %v167
  %v169 = vand.u32 %v168, 4294901760
  %170 = vmatpush1.msra.mxu0 %v169
  %171 = vmatprep.subr.mxu0 0.0
  %v172 = vand.u32 %v21, 4294901760
  %v173 = vsub.f32 %v21, %v172
  %v174 = vand.u32 %v173, 4294901760
  %v175 = vsub.f32 %v173, %v174
  %v176 = vand.u32 %v175, 4294901760
  %177 = vmatpush1.msra.mxu0 %v176
  %178 = vmatprep.subr.mxu0 0.0
  %v179 = vand.u32 %v22, 4294901760
  %v180 = vsub.f32 %v22, %v179
  %v181 = vand.u32 %v180, 4294901760
  %v182 = vsub.f32 %v180, %v181
  %v183 = vand.u32 %v182, 4294901760
  %184 = vmatpush1.msra.mxu0 %v183
  %185 = vmatprep.subr.mxu0 0.0
  %v186 = vand.u32 %v23, 4294901760
  %v187 = vsub.f32 %v23, %v186
  %v188 = vand.u32 %v187, 4294901760
  %v189 = vsub.f32 %v187, %v188
  %v190 = vand.u32 %v189, 4294901760
  %191 = vmatpush1.msra.mxu0 %v190
  %192 = vmatprep.subr.mxu0 0.0
  %v193 = vand.u32 %v24, 4294901760
  %v194 = vsub.f32 %v24, %v193
  %v195 = vand.u32 %v194, 4294901760
  %v196 = vsub.f32 %v194, %v195
  %v197 = vand.u32 %v196, 4294901760
  %198 = vmatpush1.msra.mxu0 %v197
  %199 = vmatprep.subr.mxu0 0.0
  %v200 = vand.u32 %v25, 4294901760
  %v201 = vsub.f32 %v25, %v200
  %v202 = vand.u32 %v201, 4294901760
  %v203 = vsub.f32 %v201, %v202
  %v204 = vand.u32 %v203, 4294901760
  %205 = vmatpush1.msra.mxu0 %v204
  %206 = vmatprep.subr.mxu0 0.0
  %v207 = vand.u32 %v26, 4294901760
  %v208 = vsub.f32 %v26, %v207
  %v209 = vand.u32 %v208, 4294901760
  %v210 = vsub.f32 %v208, %v209
  %v211 = vand.u32 %v210, 4294901760
  %212 = vmatpush1.msra.mxu0 %v211
  %213 = vmatprep.subr.mxu0 0.0
  %v214 = vand.u32 %v27, 4294901760
  %v215 = vsub.f32 %v27, %v214
  %v216 = vand.u32 %v215, 4294901760
  %v217 = vsub.f32 %v215, %v216
  %v218 = vand.u32 %v217, 4294901760
  %219 = vmatpush1.msra.mxu0 %v218
  %220 = vmatprep.subr.mxu0 0.0
  %v221 = vand.u32 %v28, 4294901760
  %v222 = vsub.f32 %v28, %v221
  %v223 = vand.u32 %v222, 4294901760
  %v224 = vsub.f32 %v222, %v223
  %v225 = vand.u32 %v224, 4294901760
  %226 = vmatpush1.msra.mxu0 %v225
  %227 = vmatprep.subr.mxu0 0.0
  %v228 = vand.u32 %v29, 4294901760
  %v229 = vsub.f32 %v29, %v228
  %v230 = vand.u32 %v229, 4294901760
  %v231 = vsub.f32 %v229, %v230
  %v232 = vand.u32 %v231, 4294901760
  %233 = vmatpush1.msra.mxu0 %v232
  %234 = vmatprep.subr.mxu0 0.0
  %v235 = vand.u32 %v30, 4294901760
  %v236 = vsub.f32 %v30, %v235
  %v237 = vand.u32 %v236, 4294901760
  %v238 = vsub.f32 %v236, %v237
  %v239 = vand.u32 %v238, 4294901760
  %240 = vmatpush1.msra.mxu0 %v239
  %241 = vmatprep.subr.mxu0 0.0
  %242 = vmatpush1.msra.mxu0 0.0
  %243 = vmatprep.subr.mxu0 0.0
  %244 = vmatpush1.msra.mxu0 0.0
  %245 = vmatprep.subr.mxu0 0.0
  %246 = vmatpush1.msra.mxu0 0.0
  %247 = vmatprep.subr.mxu0 0.0
  %248 = vmatpush1.msra.mxu0 0.0
  %249 = vmatprep.subr.mxu0 0.0
  %250 = vmatpush1.msra.mxu0 0.0
  %251 = vmatprep.subr.mxu0 0.0
  %252 = vmatpush1.msra.mxu0 0.0
  %253 = vmatprep.subr.mxu0 0.0
  %254 = vmatpush1.msra.mxu0 0.0
  %255 = vmatprep.subr.mxu0 0.0
  %256 = vmatpush1.msra.mxu0 0.0
  %257 = vmatprep.subr.mxu0 0.0
  %258 = vmatpush1.msra.mxu0 0.0
  %259 = vmatprep.subr.mxu0 0.0
  %260 = vmatpush1.msra.mxu0 0.0
  %261 = vmatprep.subr.mxu0 0.0
  %262 = vmatpush1.msra.mxu0 0.0
  %263 = vmatprep.subr.mxu0 0.0
  %264 = vmatpush1.msra.mxu0 0.0
  %265 = vmatprep.subr.mxu0 0.0
  %266 = vmatpush1.msra.mxu0 0.0
  %267 = vmatprep.subr.mxu0 0.0
  %268 = vmatpush1.msra.mxu0 0.0
  %269 = vmatprep.subr.mxu0 0.0
  %270 = vmatpush1.msra.mxu0 0.0
  %271 = vmatprep.subr.mxu0 0.0
  %272 = vmatpush1.msra.mxu0 0.0
  %273 = vmatprep.mubr.f32.mxu0 0.0
  %v274 = vand.u32 %v14, 4294901760
  %275 = vmatmul.mubr.f32.gmra.mrb[0].mxu0 %v274
  %v276 = vpop.f32.mrb[0].mxu0
  %v277 = vadd.f32 %v126, %v276
  %v278 = vpop.f32.mrb[0].mxu0
  %279 = vdwg.mxu0
  %280 = vmatprep.subr.mxu0 0.0
  %v281 = vand.u32 %v15, 4294901760
  %v282 = vsub.f32 %v15, %v281
  %283 = vmatpush1.msra.mxu0 %v282
  %284 = vmatprep.subr.mxu0 0.0
  %v285 = vand.u32 %v16, 4294901760
  %v286 = vsub.f32 %v16, %v285
  %287 = vmatpush1.msra.mxu0 %v286
  %288 = vmatprep.subr.mxu0 0.0
  %v289 = vand.u32 %v17, 4294901760
  %v290 = vsub.f32 %v17, %v289
  %291 = vmatpush1.msra.mxu0 %v290
  %292 = vmatprep.subr.mxu0 0.0
  %v293 = vand.u32 %v18, 4294901760
  %v294 = vsub.f32 %v18, %v293
  %295 = vmatpush1.msra.mxu0 %v294
  %296 = vmatprep.subr.mxu0 0.0
  %v297 = vand.u32 %v19, 4294901760
  %v298 = vsub.f32 %v19, %v297
  %299 = vmatpush1.msra.mxu0 %v298
  %300 = vmatprep.subr.mxu0 0.0
  %v301 = vand.u32 %v20, 4294901760
  %v302 = vsub.f32 %v20, %v301
  %303 = vmatpush1.msra.mxu0 %v302
  %304 = vmatprep.subr.mxu0 0.0
  %v305 = vand.u32 %v21, 4294901760
  %v306 = vsub.f32 %v21, %v305
  %307 = vmatpush1.msra.mxu0 %v306
  %308 = vmatprep.subr.mxu0 0.0
  %v309 = vand.u32 %v22, 4294901760
  %v310 = vsub.f32 %v22, %v309
  %311 = vmatpush1.msra.mxu0 %v310
  %312 = vmatprep.subr.mxu0 0.0
  %v313 = vand.u32 %v23, 4294901760
  %v314 = vsub.f32 %v23, %v313
  %315 = vmatpush1.msra.mxu0 %v314
  %316 = vmatprep.subr.mxu0 0.0
  %v317 = vand.u32 %v24, 4294901760
  %v318 = vsub.f32 %v24, %v317
  %319 = vmatpush1.msra.mxu0 %v318
  %320 = vmatprep.subr.mxu0 0.0
  %v321 = vand.u32 %v25, 4294901760
  %v322 = vsub.f32 %v25, %v321
  %323 = vmatpush1.msra.mxu0 %v322
  %324 = vmatprep.subr.mxu0 0.0
  %v325 = vand.u32 %v26, 4294901760
  %v326 = vsub.f32 %v26, %v325
  %327 = vmatpush1.msra.mxu0 %v326
  %328 = vmatprep.subr.mxu0 0.0
  %v329 = vand.u32 %v27, 4294901760
  %v330 = vsub.f32 %v27, %v329
  %331 = vmatpush1.msra.mxu0 %v330
  %332 = vmatprep.subr.mxu0 0.0
  %v333 = vand.u32 %v28, 4294901760
  %v334 = vsub.f32 %v28, %v333
  %335 = vmatpush1.msra.mxu0 %v334
  %336 = vmatprep.subr.mxu0 0.0
  %v337 = vand.u32 %v29, 4294901760
  %v338 = vsub.f32 %v29, %v337
  %339 = vmatpush1.msra.mxu0 %v338
  %340 = vmatprep.subr.mxu0 0.0
  %v341 = vand.u32 %v30, 4294901760
  %v342 = vsub.f32 %v30, %v341
  %343 = vmatpush1.msra.mxu0 %v342
  %344 = vmatprep.subr.mxu0 0.0
  %345 = vmatpush1.msra.mxu0 0.0
  %346 = vmatprep.subr.mxu0 0.0
  %347 = vmatpush1.msra.mxu0 0.0
  %348 = vmatprep.subr.mxu0 0.0
  %349 = vmatpush1.msra.mxu0 0.0
  %350 = vmatprep.subr.mxu0 0.0
  %351 = vmatpush1.msra.mxu0 0.0
  %352 = vmatprep.subr.mxu0 0.0
  %353 = vmatpush1.msra.mxu0 0.0
  %354 = vmatprep.subr.mxu0 0.0
  %355 = vmatpush1.msra.mxu0 0.0
  %356 = vmatprep.subr.mxu0 0.0
  %357 = vmatpush1.msra.mxu0 0.0
  %358 = vmatprep.subr.mxu0 0.0
  %359 = vmatpush1.msra.mxu0 0.0
  %360 = vmatprep.subr.mxu0 0.0
  %361 = vmatpush1.msra.mxu0 0.0
  %362 = vmatprep.subr.mxu0 0.0
  %363 = vmatpush1.msra.mxu0 0.0
  %364 = vmatprep.subr.mxu0 0.0
  %365 = vmatpush1.msra.mxu0 0.0
  %366 = vmatprep.subr.mxu0 0.0
  %367 = vmatpush1.msra.mxu0 0.0
  %368 = vmatprep.subr.mxu0 0.0
  %369 = vmatpush1.msra.mxu0 0.0
  %370 = vmatprep.subr.mxu0 0.0
  %371 = vmatpush1.msra.mxu0 0.0
  %372 = vmatprep.subr.mxu0 0.0
  %373 = vmatpush1.msra.mxu0 0.0
  %374 = vmatprep.subr.mxu0 0.0
  %375 = vmatpush1.msra.mxu0 0.0
  %376 = vmatprep.mubr.f32.mxu0 0.0
  %v377 = vand.u32 %v14, 4294901760
  %v378 = vsub.f32 %v14, %v377
  %379 = vmatmul.mubr.f32.gmra.mrb[0].mxu0 %v378
  %v380 = vpop.f32.mrb[0].mxu0
  %v381 = vadd.f32 %v277, %v380
  %v382 = vpop.f32.mrb[0].mxu0
  %383 = vdwg.mxu0
  %384 = vmatprep.subr.mxu0 0.0
  %v385 = vand.u32 %v15, 4294901760
  %386 = vmatpush1.msra.mxu0 %v385
  %387 = vmatprep.subr.mxu0 0.0
  %v388 = vand.u32 %v16, 4294901760
  %389 = vmatpush1.msra.mxu0 %v388
  %390 = vmatprep.subr.mxu0 0.0
  %v391 = vand.u32 %v17, 4294901760
  %392 = vmatpush1.msra.mxu0 %v391
  %393 = vmatprep.subr.mxu0 0.0
  %v394 = vand.u32 %v18, 4294901760
  %395 = vmatpush1.msra.mxu0 %v394
  %396 = vmatprep.subr.mxu0 0.0
  %v397 = vand.u32 %v19, 4294901760
  %398 = vmatpush1.msra.mxu0 %v397
  %399 = vmatprep.subr.mxu0 0.0
  %v400 = vand.u32 %v20, 4294901760
  %401 = vmatpush1.msra.mxu0 %v400
  %402 = vmatprep.subr.mxu0 0.0
  %v403 = vand.u32 %v21, 4294901760
  %404 = vmatpush1.msra.mxu0 %v403
  %405 = vmatprep.subr.mxu0 0.0
  %v406 = vand.u32 %v22, 4294901760
  %407 = vmatpush1.msra.mxu0 %v406
  %408 = vmatprep.subr.mxu0 0.0
  %v409 = vand.u32 %v23, 4294901760
  %410 = vmatpush1.msra.mxu0 %v409
  %411 = vmatprep.subr.mxu0 0.0
  %v412 = vand.u32 %v24, 4294901760
  %413 = vmatpush1.msra.mxu0 %v412
  %414 = vmatprep.subr.mxu0 0.0
  %v415 = vand.u32 %v25, 4294901760
  %416 = vmatpush1.msra.mxu0 %v415
  %417 = vmatprep.subr.mxu0 0.0
  %v418 = vand.u32 %v26, 4294901760
  %419 = vmatpush1.msra.mxu0 %v418
  %420 = vmatprep.subr.mxu0 0.0
  %v421 = vand.u32 %v27, 4294901760
  %422 = vmatpush1.msra.mxu0 %v421
  %423 = vmatprep.subr.mxu0 0.0
  %v424 = vand.u32 %v28, 4294901760
  %425 = vmatpush1.msra.mxu0 %v424
  %426 = vmatprep.subr.mxu0 0.0
  %v427 = vand.u32 %v29, 4294901760
  %428 = vmatpush1.msra.mxu0 %v427
  %429 = vmatprep.subr.mxu0 0.0
  %v430 = vand.u32 %v30, 4294901760
  %431 = vmatpush1.msra.mxu0 %v430
  %432 = vmatprep.subr.mxu0 0.0
  %433 = vmatpush1.msra.mxu0 0.0
  %434 = vmatprep.subr.mxu0 0.0
  %435 = vmatpush1.msra.mxu0 0.0
  %436 = vmatprep.subr.mxu0 0.0
  %437 = vmatpush1.msra.mxu0 0.0
  %438 = vmatprep.subr.mxu0 0.0
  %439 = vmatpush1.msra.mxu0 0.0
  %440 = vmatprep.subr.mxu0 0.0
  %441 = vmatpush1.msra.mxu0 0.0
  %442 = vmatprep.subr.mxu0 0.0
  %443 = vmatpush1.msra.mxu0 0.0
  %444 = vmatprep.subr.mxu0 0.0
  %445 = vmatpush1.msra.mxu0 0.0
  %446 = vmatprep.subr.mxu0 0.0
  %447 = vmatpush1.msra.mxu0 0.0
  %448 = vmatprep.subr.mxu0 0.0
  %449 = vmatpush1.msra.mxu0 0.0
  %450 = vmatprep.subr.mxu0 0.0
  %451 = vmatpush1.msra.mxu0 0.0
  %452 = vmatprep.subr.mxu0 0.0
  %453 = vmatpush1.msra.mxu0 0.0
  %454 = vmatprep.subr.mxu0 0.0
  %455 = vmatpush1.msra.mxu0 0.0
  %456 = vmatprep.subr.mxu0 0.0
  %457 = vmatpush1.msra.mxu0 0.0
  %458 = vmatprep.subr.mxu0 0.0
  %459 = vmatpush1.msra.mxu0 0.0
  %460 = vmatprep.subr.mxu0 0.0
  %461 = vmatpush1.msra.mxu0 0.0
  %462 = vmatprep.subr.mxu0 0.0
  %463 = vmatpush1.msra.mxu0 0.0
  %464 = vmatprep.mubr.f32.mxu0 0.0
  %v465 = vand.u32 %v14, 4294901760
  %v466 = vsub.f32 %v14, %v465
  %v467 = vand.u32 %v466, 4294901760
  %468 = vmatmul.mubr.f32.gmra.mrb[0].mxu0 %v467
  %v469 = vpop.f32.mrb[0].mxu0
  %v470 = vadd.f32 %v381, %v469
  %v471 = vpop.f32.mrb[0].mxu0
  %472 = vdwg.mxu0
  %473 = vmatprep.subr.mxu0 0.0
  %v474 = vand.u32 %v15, 4294901760
  %v475 = vsub.f32 %v15, %v474
  %v476 = vand.u32 %v475, 4294901760
  %477 = vmatpush1.msra.mxu0 %v476
  %478 = vmatprep.subr.mxu0 0.0
  %v479 = vand.u32 %v16, 4294901760
  %v480 = vsub.f32 %v16, %v479
  %v481 = vand.u32 %v480, 4294901760
  %482 = vmatpush1.msra.mxu0 %v481
  %483 = vmatprep.subr.mxu0 0.0
  %v484 = vand.u32 %v17, 4294901760
  %v485 = vsub.f32 %v17, %v484
  %v486 = vand.u32 %v485, 4294901760
  %487 = vmatpush1.msra.mxu0 %v486
  %488 = vmatprep.subr.mxu0 0.0
  %v489 = vand.u32 %v18, 4294901760
  %v490 = vsub.f32 %v18, %v489
  %v491 = vand.u32 %v490, 4294901760
  %492 = vmatpush1.msra.mxu0 %v491
  %493 = vmatprep.subr.mxu0 0.0
  %v494 = vand.u32 %v19, 4294901760
  %v495 = vsub.f32 %v19, %v494
  %v496 = vand.u32 %v495, 4294901760
  %497 = vmatpush1.msra.mxu0 %v496
  %498 = vmatprep.subr.mxu0 0.0
  %v499 = vand.u32 %v20, 4294901760
  %v500 = vsub.f32 %v20, %v499
  %v501 = vand.u32 %v500, 4294901760
  %502 = vmatpush1.msra.mxu0 %v501
  %503 = vmatprep.subr.mxu0 0.0
  %v504 = vand.u32 %v21, 4294901760
  %v505 = vsub.f32 %v21, %v504
  %v506 = vand.u32 %v505, 4294901760
  %507 = vmatpush1.msra.mxu0 %v506
  %508 = vmatprep.subr.mxu0 0.0
  %v509 = vand.u32 %v22, 4294901760
  %v510 = vsub.f32 %v22, %v509
  %v511 = vand.u32 %v510, 4294901760
  %512 = vmatpush1.msra.mxu0 %v511
  %513 = vmatprep.subr.mxu0 0.0
  %v514 = vand.u32 %v23, 4294901760
  %v515 = vsub.f32 %v23, %v514
  %v516 = vand.u32 %v515, 4294901760
  %517 = vmatpush1.msra.mxu0 %v516
  %518 = vmatprep.subr.mxu0 0.0
  %v519 = vand.u32 %v24, 4294901760
  %v520 = vsub.f32 %v24, %v519
  %v521 = vand.u32 %v520, 4294901760
  %522 = vmatpush1.msra.mxu0 %v521
  %523 = vmatprep.subr.mxu0 0.0
  %v524 = vand.u32 %v25, 4294901760
  %v525 = vsub.f32 %v25, %v524
  %v526 = vand.u32 %v525, 4294901760
  %527 = vmatpush1.msra.mxu0 %v526
  %528 = vmatprep.subr.mxu0 0.0
  %v529 = vand.u32 %v26, 4294901760
  %v530 = vsub.f32 %v26, %v529
  %v531 = vand.u32 %v530, 4294901760
  %532 = vmatpush1.msra.mxu0 %v531
  %533 = vmatprep.subr.mxu0 0.0
  %v534 = vand.u32 %v27, 4294901760
  %v535 = vsub.f32 %v27, %v534
  %v536 = vand.u32 %v535, 4294901760
  %537 = vmatpush1.msra.mxu0 %v536
  %538 = vmatprep.subr.mxu0 0.0
  %v539 = vand.u32 %v28, 4294901760
  %v540 = vsub.f32 %v28, %v539
  %v541 = vand.u32 %v540, 4294901760
  %542 = vmatpush1.msra.mxu0 %v541
  %543 = vmatprep.subr.mxu0 0.0
  %v544 = vand.u32 %v29, 4294901760
  %v545 = vsub.f32 %v29, %v544
  %v546 = vand.u32 %v545, 4294901760
  %547 = vmatpush1.msra.mxu0 %v546
  %548 = vmatprep.subr.mxu0 0.0
  %v549 = vand.u32 %v30, 4294901760
  %v550 = vsub.f32 %v30, %v549
  %v551 = vand.u32 %v550, 4294901760
  %552 = vmatpush1.msra.mxu0 %v551
  %553 = vmatprep.subr.mxu0 0.0
  %554 = vmatpush1.msra.mxu0 0.0
  %555 = vmatprep.subr.mxu0 0.0
  %556 = vmatpush1.msra.mxu0 0.0
  %557 = vmatprep.subr.mxu0 0.0
  %558 = vmatpush1.msra.mxu0 0.0
  %559 = vmatprep.subr.mxu0 0.0
  %560 = vmatpush1.msra.mxu0 0.0
  %561 = vmatprep.subr.mxu0 0.0
  %562 = vmatpush1.msra.mxu0 0.0
  %563 = vmatprep.subr.mxu0 0.0
  %564 = vmatpush1.msra.mxu0 0.0
  %565 = vmatprep.subr.mxu0 0.0
  %566 = vmatpush1.msra.mxu0 0.0
  %567 = vmatprep.subr.mxu0 0.0
  %568 = vmatpush1.msra.mxu0 0.0
  %569 = vmatprep.subr.mxu0 0.0
  %570 = vmatpush1.msra.mxu0 0.0
  %571 = vmatprep.subr.mxu0 0.0
  %572 = vmatpush1.msra.mxu0 0.0
  %573 = vmatprep.subr.mxu0 0.0
  %574 = vmatpush1.msra.mxu0 0.0
  %575 = vmatprep.subr.mxu0 0.0
  %576 = vmatpush1.msra.mxu0 0.0
  %577 = vmatprep.subr.mxu0 0.0
  %578 = vmatpush1.msra.mxu0 0.0
  %579 = vmatprep.subr.mxu0 0.0
  %580 = vmatpush1.msra.mxu0 0.0
  %581 = vmatprep.subr.mxu0 0.0
  %582 = vmatpush1.msra.mxu0 0.0
  %583 = vmatprep.subr.mxu0 0.0
  %584 = vmatpush1.msra.mxu0 0.0
  %585 = vmatprep.mubr.f32.mxu0 0.0
  %v586 = vand.u32 %v14, 4294901760
  %587 = vmatmul.mubr.f32.gmra.mrb[0].mxu0 %v586
  %v588 = vpop.f32.mrb[0].mxu0
  %v589 = vadd.f32 %v470, %v588
  %v590 = vpop.f32.mrb[0].mxu0
  %591 = vdwg.mxu0
  %592 = vmatprep.subr.mxu0 0.0
  %v593 = vand.u32 %v15, 4294901760
  %594 = vmatpush1.msra.mxu0 %v593
  %595 = vmatprep.subr.mxu0 0.0
  %v596 = vand.u32 %v16, 4294901760
  %597 = vmatpush1.msra.mxu0 %v596
  %598 = vmatprep.subr.mxu0 0.0
  %v599 = vand.u32 %v17, 4294901760
  %600 = vmatpush1.msra.mxu0 %v599
  %601 = vmatprep.subr.mxu0 0.0
  %v602 = vand.u32 %v18, 4294901760
  %603 = vmatpush1.msra.mxu0 %v602
  %604 = vmatprep.subr.mxu0 0.0
  %v605 = vand.u32 %v19, 4294901760
  %606 = vmatpush1.msra.mxu0 %v605
  %607 = vmatprep.subr.mxu0 0.0
  %v608 = vand.u32 %v20, 4294901760
  %609 = vmatpush1.msra.mxu0 %v608
  %610 = vmatprep.subr.mxu0 0.0
  %v611 = vand.u32 %v21, 4294901760
  %612 = vmatpush1.msra.mxu0 %v611
  %613 = vmatprep.subr.mxu0 0.0
  %v614 = vand.u32 %v22, 4294901760
  %615 = vmatpush1.msra.mxu0 %v614
  %616 = vmatprep.subr.mxu0 0.0
  %v617 = vand.u32 %v23, 4294901760
  %618 = vmatpush1.msra.mxu0 %v617
  %619 = vmatprep.subr.mxu0 0.0
  %v620 = vand.u32 %v24, 4294901760
  %621 = vmatpush1.msra.mxu0 %v620
  %622 = vmatprep.subr.mxu0 0.0
  %v623 = vand.u32 %v25, 4294901760
  %624 = vmatpush1.msra.mxu0 %v623
  %625 = vmatprep.subr.mxu0 0.0
  %v626 = vand.u32 %v26, 4294901760
  %627 = vmatpush1.msra.mxu0 %v626
  %628 = vmatprep.subr.mxu0 0.0
  %v629 = vand.u32 %v27, 4294901760
  %630 = vmatpush1.msra.mxu0 %v629
  %631 = vmatprep.subr.mxu0 0.0
  %v632 = vand.u32 %v28, 4294901760
  %633 = vmatpush1.msra.mxu0 %v632
  %634 = vmatprep.subr.mxu0 0.0
  %v635 = vand.u32 %v29, 4294901760
  %636 = vmatpush1.msra.mxu0 %v635
  %637 = vmatprep.subr.mxu0 0.0
  %v638 = vand.u32 %v30, 4294901760
  %639 = vmatpush1.msra.mxu0 %v638
  %640 = vmatprep.subr.mxu0 0.0
  %641 = vmatpush1.msra.mxu0 0.0
  %642 = vmatprep.subr.mxu0 0.0
  %643 = vmatpush1.msra.mxu0 0.0
  %644 = vmatprep.subr.mxu0 0.0
  %645 = vmatpush1.msra.mxu0 0.0
  %646 = vmatprep.subr.mxu0 0.0
  %647 = vmatpush1.msra.mxu0 0.0
  %648 = vmatprep.subr.mxu0 0.0
  %649 = vmatpush1.msra.mxu0 0.0
  %650 = vmatprep.subr.mxu0 0.0
  %651 = vmatpush1.msra.mxu0 0.0
  %652 = vmatprep.subr.mxu0 0.0
  %653 = vmatpush1.msra.mxu0 0.0
  %654 = vmatprep.subr.mxu0 0.0
  %655 = vmatpush1.msra.mxu0 0.0
  %656 = vmatprep.subr.mxu0 0.0
  %657 = vmatpush1.msra.mxu0 0.0
  %658 = vmatprep.subr.mxu0 0.0
  %659 = vmatpush1.msra.mxu0 0.0
  %660 = vmatprep.subr.mxu0 0.0
  %661 = vmatpush1.msra.mxu0 0.0
  %662 = vmatprep.subr.mxu0 0.0
  %663 = vmatpush1.msra.mxu0 0.0
  %664 = vmatprep.subr.mxu0 0.0
  %665 = vmatpush1.msra.mxu0 0.0
  %666 = vmatprep.subr.mxu0 0.0
  %667 = vmatpush1.msra.mxu0 0.0
  %668 = vmatprep.subr.mxu0 0.0
  %669 = vmatpush1.msra.mxu0 0.0
  %670 = vmatprep.subr.mxu0 0.0
  %671 = vmatpush1.msra.mxu0 0.0
  %672 = vmatprep.mubr.f32.mxu0 0.0
  %v673 = vand.u32 %v14, 4294901760
  %674 = vmatmul.mubr.f32.gmra.mrb[0].mxu0 %v673
  %v675 = vpop.f32.mrb[0].mxu0
  %v676 = vadd.f32 %v589, %v675
  %v677 = vpop.f32.mrb[0].mxu0
  %678 = vdwg.mxu0
  %vm679 = vcmask 523264
  %680 = vst.msk [vmem:[%s3] sm:$0xff] %vm679, %v676
  // Predicated region
  $region14: #{cpu_offload_model_forward.1} parent=0 // pred_check
    _
  $region15: #{cpu_offload_model_forward.1} parent=0 // pred_check_branch
    %682 = sbr.rel (0) target = $region17
  $region16: #{cpu_offload_model_forward.1} parent=0 // pred_region
    _
  $region17: #{cpu_offload_model_forward.1} parent=0 // pred_fallthru
    _
  // Predicated region
  $region18: #{cpu_offload_model_forward.1} parent=0 // pred_check
    _
  $region19: #{cpu_offload_model_forward.1} parent=0 // pred_check_branch
    %684 = sbr.rel (0) target = $region21
  $region20: #{cpu_offload_model_forward.1} parent=0 // pred_region
    _
  $region21: #{cpu_offload_model_forward.1} parent=0 // pred_fallthru
    _

</llo_original>
